<compile_context>
chip_gen: v7x
topology: tpu7x:2x2x1
jax: 0.10.0
libtpu: 0.0.40
codegen_flags: <defaults>
</compile_context>

<pallas_src>
import functools

import jax
import jax.numpy as jnp
from jax.experimental import pallas as pl
from jax.experimental.pallas import tpu as pltpu


def _minvar_kernel(x_ref, out_ref, *, n, T):
    m = n + 1                                # KKT size: n assets + 1 multiplier
    F = T * n
    B = x_ref.shape[0]                       # batch block size (becomes lanes)

    # (B, T*n) -> (T*n, B): move batch into the lane (minor) dim.  Everything
    # below is lane-parallel over B independent portfolios (pure VPU work).
    xt = jnp.transpose(x_ref[...].astype(jnp.float32))          # (F, B)

    # group_sum: out[i, :] = sum_t a[t*n + i, :]   for a of shape (F, B).
    def group_sum(a):
        if F % 8 == 0 and 8 % n == 0:
            # Sum aligned 8-row tiles first (cheap), then fold 8 -> n rows.
            s = a[0:8, :]
            for k in range(1, F // 8):
                s = s + a[8 * k:8 * k + 8, :]
            out = s[0:n, :]
            for j in range(1, 8 // n):
                out = out + s[j * n:(j + 1) * n, :]
            return out
        out = a[0:n, :]
        for t in range(1, T):
            out = out + a[t * n:(t + 1) * n, :]
        return out

    # --- unbiased sample covariance (two-pass, matches the torch reference) --
    mean_n = group_sum(xt) * (1.0 / T)                           # (n, B)
    mean_rep = jnp.concatenate([mean_n] * T, axis=0)             # (F, B)
    xc = xt - mean_rep                                           # centered

    inv_tm1 = 1.0 / (T - 1)
    # S[d][i] = cov[i, i + d]  (only rows i with i + d < n are meaningful);
    # symmetry means d = 0..n-1 covers all n(n+1)/2 distinct entries.
    S = []
    for d in range(n):
        if d == 0:
            prod = xc * xc
        else:
            shifted = jnp.concatenate(
                [xc[d:, :], jnp.zeros((d, B), jnp.float32)], axis=0)
            prod = xc * shifted
        S.append(group_sum(prod) * inv_tm1)                      # (n, B)

    # --- assemble the KKT system [A | b] as m rows of shape (m+1, B) ---------
    one = jnp.ones((1, B), jnp.float32)
    zero = jnp.zeros((1, B), jnp.float32)
    rows = []
    for i in range(n):
        pieces = []
        for j in range(n):
            d, lo = abs(j - i), min(i, j)
            pieces.append(S[d][lo:lo + 1, :])                    # cov[i, j]
        pieces.append(one)                                       # multiplier col
        pieces.append(zero)                                      # RHS
        rows.append(jnp.concatenate(pieces, axis=0))             # (m+1, B)
    rows.append(jnp.concatenate([one] * n + [zero, one], axis=0))  # constraint

    # --- Gauss-Jordan, statically unrolled, no pivoting ----------------------
    # (cov SPD => the first n pivots are positive Schur complements and the
    #  last pivot is -1^T cov^{-1} 1 != 0.)
    for k in range(m):
        piv = rows[k][k:k + 1, :]                                # (1, B)
        r0 = pl.reciprocal(piv, approx=True)                     # EUP slot
        inv_piv = r0 * (2.0 - piv * r0)                          # Newton -> ~f32
        pivot_row = rows[k] * inv_piv                            # (m+1, B)
        new_rows = []
        for r in range(m):
            if r == k:
                new_rows.append(pivot_row)                       # in-place swap,
            else:                                                # no slab select
                new_rows.append(rows[r] - rows[r][k:k + 1, :] * pivot_row)
        rows = new_rows

    # Solution = augmented (last) column of every row: lane-dense (m, B) store.
    out_ref[...] = jnp.concatenate(
        [rows[i][m:m + 1, :] for i in range(m)], axis=0).astype(out_ref.dtype)


def min_variance(x, *, b_blk=None):
    """x: (batch, T, n) -> target weights + multiplier, (batch, n+1, 1)."""
    batch, T, n = x.shape
    assert T >= 2, "need at least 2 observations for the sample covariance"
    m = n + 1
    F = T * n
    if not jnp.issubdtype(x.dtype, jnp.floating):
        x = x.astype(jnp.float32)

    # Free, contiguous reshape — no HBM relayout pass in the wrapper.
    xf = jnp.reshape(x, (batch, F))

    if b_blk is None:
        if batch <= 256:
            b_blk = batch                          # single block; tiny problems
        elif batch <= 8192:
            # ~batch/2 rounded to a multiple of 128 -> exactly 2 grid steps so
            # v7x's two TensorCores both get work.
            b_blk = ((batch + 255) // 256) * 128
        else:
            b_blk = 4096                           # large lane blocks; grid >= 3

    grid_n = -(-batch // b_blk)                    # cdiv
    batch_p = grid_n * b_blk
    if batch_p != batch:
        # Replicate the last portfolio so padded lanes stay well conditioned;
        # their results are discarded by the [:batch] slice below.
        pad = jnp.broadcast_to(xf[-1:], (batch_p - batch, F))
        xf = jnp.concatenate([xf, pad], axis=0)

    kernel = functools.partial(_minvar_kernel, n=n, T=T)
    out = pl.pallas_call(
        kernel,
        out_shape=jax.ShapeDtypeStruct((m, batch_p), jnp.float32),
        grid_spec=pltpu.PrefetchScalarGridSpec(
            num_scalar_prefetch=0,
            grid=(grid_n,),
            in_specs=[pl.BlockSpec((b_blk, F), lambda b: (b, 0))],
            out_specs=pl.BlockSpec((m, b_blk), lambda b: (0, b)),
        ),
        compiler_params=pltpu.CompilerParams(
            dimension_semantics=("parallel",),     # shard blocks across TCs
            vmem_limit_bytes=32 * 1024 * 1024,     # fits v7x's 64 MiB w/ headroom
        ),
    )(xf)

    return jnp.transpose(out)[:batch, :, None]                   # (batch, m, 1)


def _reference(x):
    """Pure-JAX replica of the PyTorch forward (sample-cov estimator)."""
    b, T, n = x.shape
    x = x.astype(jnp.float32)
    mean = x.mean(axis=1, keepdims=True)
    xc = x - mean
    cov = jnp.einsum("bti,btj->bij", xc, xc) / (T - 1)
    m = n + 1
    A = jnp.zeros((b, m, m), jnp.float32)
    A = A.at[:, :n, :n].set(cov)
    A = A.at[:, n, :n].set(1.0)
    A = A.at[:, :n, n].set(1.0)
    B = jnp.zeros((b, m, 1), jnp.float32).at[:, n].set(1.0)
    return jnp.linalg.solve(A, B)


if __name__ == "__main__":
    T, n = 16, 4
    key = jax.random.PRNGKey(0)

    # Small single-block case.
    batch = 2
    x = jax.random.normal(key, (batch, T, n), dtype=jnp.float32) * 0.02
    out = jax.block_until_ready(min_variance(x))
    ref = jax.block_until_ready(_reference(x))
    assert out.shape == (batch, n + 1, 1), out.shape
    assert jnp.allclose(out, ref, rtol=1e-3, atol=1e-4)
    assert jnp.allclose(out[:, :n, 0].sum(axis=1), 1.0, atol=1e-4)

    # Multi-block case: exercises grid > 1, batch padding and lane-dense output.
    batch2 = 300
    x2 = jax.random.normal(jax.random.PRNGKey(1), (batch2, T, n),
                           dtype=jnp.float32) * 0.02
    out2 = jax.block_until_ready(min_variance(x2))
    ref2 = jax.block_until_ready(_reference(x2))
    assert out2.shape == (batch2, n + 1, 1), out2.shape
    assert jnp.allclose(out2, ref2, rtol=1e-3, atol=1e-4)
    assert jnp.allclose(out2[:, :n, 0].sum(axis=1), 1.0, atol=1e-4)

    print("KERNEL_OK")
</pallas_src>

<mosaic_0001>
module attributes {stable_mosaic.version = 11 : i64} {
  func.func @_minvar_kernel(%arg0: i32, %arg1: memref<2x64xf32, #tpu.memory_space<vmem>>, %arg2: memref<5x2xf32, #tpu.memory_space<vmem>>) attributes {dimension_semantics = [#tpu.dimension_semantics<parallel>], iteration_bounds = array<i64: 1>, scalar_prefetch = 0 : i64, scratch_operands = 0 : i64, tpu.core_type = #tpu.core_type<tc>, window_params = [{transform_indices = @transform_0, window_bounds = array<i64: 2, 64>}, {transform_indices = @transform_1, window_bounds = array<i64: 5, 2>}]} {
    %c0 = arith.constant 0 : index
    %c0_0 = arith.constant 0 : index
    %0 = vector.load %arg1[%c0, %c0_0] : memref<2x64xf32, #tpu.memory_space<vmem>>, vector<2x64xf32>
    %1 = tpu.transpose %0, [1, 0] : vector<2x64xf32> -> vector<64x2xf32>
    %2 = vector.extract_strided_slice %1 {offsets = [0, 0], sizes = [8, 2], strides = [1, 1]} : vector<64x2xf32> to vector<8x2xf32>
    %3 = vector.extract_strided_slice %1 {offsets = [8, 0], sizes = [8, 2], strides = [1, 1]} : vector<64x2xf32> to vector<8x2xf32>
    %4 = arith.addf %2, %3 : vector<8x2xf32>
    %5 = vector.extract_strided_slice %1 {offsets = [16, 0], sizes = [8, 2], strides = [1, 1]} : vector<64x2xf32> to vector<8x2xf32>
    %6 = arith.addf %4, %5 : vector<8x2xf32>
    %7 = vector.extract_strided_slice %1 {offsets = [24, 0], sizes = [8, 2], strides = [1, 1]} : vector<64x2xf32> to vector<8x2xf32>
    %8 = arith.addf %6, %7 : vector<8x2xf32>
    %9 = vector.extract_strided_slice %1 {offsets = [32, 0], sizes = [8, 2], strides = [1, 1]} : vector<64x2xf32> to vector<8x2xf32>
    %10 = arith.addf %8, %9 : vector<8x2xf32>
    %11 = vector.extract_strided_slice %1 {offsets = [40, 0], sizes = [8, 2], strides = [1, 1]} : vector<64x2xf32> to vector<8x2xf32>
    %12 = arith.addf %10, %11 : vector<8x2xf32>
    %13 = vector.extract_strided_slice %1 {offsets = [48, 0], sizes = [8, 2], strides = [1, 1]} : vector<64x2xf32> to vector<8x2xf32>
    %14 = arith.addf %12, %13 : vector<8x2xf32>
    %15 = vector.extract_strided_slice %1 {offsets = [56, 0], sizes = [8, 2], strides = [1, 1]} : vector<64x2xf32> to vector<8x2xf32>
    %16 = arith.addf %14, %15 : vector<8x2xf32>
    %17 = vector.extract_strided_slice %16 {offsets = [0, 0], sizes = [4, 2], strides = [1, 1]} : vector<8x2xf32> to vector<4x2xf32>
    %18 = vector.extract_strided_slice %16 {offsets = [4, 0], sizes = [4, 2], strides = [1, 1]} : vector<8x2xf32> to vector<4x2xf32>
    %19 = arith.addf %17, %18 : vector<4x2xf32>
    %cst = arith.constant 6.250000e-02 : f32
    %20 = vector.broadcast %cst : f32 to vector<4x2xf32>
    %21 = arith.mulf %19, %20 : vector<4x2xf32>
    %22 = tpu.concatenate %21, %21, %21, %21, %21, %21, %21, %21, %21, %21, %21, %21, %21, %21, %21, %21 in 0 : vector<4x2xf32>, vector<4x2xf32>, vector<4x2xf32>, vector<4x2xf32>, vector<4x2xf32>, vector<4x2xf32>, vector<4x2xf32>, vector<4x2xf32>, vector<4x2xf32>, vector<4x2xf32>, vector<4x2xf32>, vector<4x2xf32>, vector<4x2xf32>, vector<4x2xf32>, vector<4x2xf32>, vector<4x2xf32> -> vector<64x2xf32>
    %23 = arith.subf %1, %22 : vector<64x2xf32>
    %24 = arith.mulf %23, %23 : vector<64x2xf32>
    %25 = vector.extract_strided_slice %24 {offsets = [0, 0], sizes = [8, 2], strides = [1, 1]} : vector<64x2xf32> to vector<8x2xf32>
    %26 = vector.extract_strided_slice %24 {offsets = [8, 0], sizes = [8, 2], strides = [1, 1]} : vector<64x2xf32> to vector<8x2xf32>
    %27 = arith.addf %25, %26 : vector<8x2xf32>
    %28 = vector.extract_strided_slice %24 {offsets = [16, 0], sizes = [8, 2], strides = [1, 1]} : vector<64x2xf32> to vector<8x2xf32>
    %29 = arith.addf %27, %28 : vector<8x2xf32>
    %30 = vector.extract_strided_slice %24 {offsets = [24, 0], sizes = [8, 2], strides = [1, 1]} : vector<64x2xf32> to vector<8x2xf32>
    %31 = arith.addf %29, %30 : vector<8x2xf32>
    %32 = vector.extract_strided_slice %24 {offsets = [32, 0], sizes = [8, 2], strides = [1, 1]} : vector<64x2xf32> to vector<8x2xf32>
    %33 = arith.addf %31, %32 : vector<8x2xf32>
    %34 = vector.extract_strided_slice %24 {offsets = [40, 0], sizes = [8, 2], strides = [1, 1]} : vector<64x2xf32> to vector<8x2xf32>
    %35 = arith.addf %33, %34 : vector<8x2xf32>
    %36 = vector.extract_strided_slice %24 {offsets = [48, 0], sizes = [8, 2], strides = [1, 1]} : vector<64x2xf32> to vector<8x2xf32>
    %37 = arith.addf %35, %36 : vector<8x2xf32>
    %38 = vector.extract_strided_slice %24 {offsets = [56, 0], sizes = [8, 2], strides = [1, 1]} : vector<64x2xf32> to vector<8x2xf32>
    %39 = arith.addf %37, %38 : vector<8x2xf32>
    %40 = vector.extract_strided_slice %39 {offsets = [0, 0], sizes = [4, 2], strides = [1, 1]} : vector<8x2xf32> to vector<4x2xf32>
    %41 = vector.extract_strided_slice %39 {offsets = [4, 0], sizes = [4, 2], strides = [1, 1]} : vector<8x2xf32> to vector<4x2xf32>
    %42 = arith.addf %40, %41 : vector<4x2xf32>
    %cst_1 = arith.constant 0.0666666701 : f32
    %43 = vector.broadcast %cst_1 : f32 to vector<4x2xf32>
    %44 = arith.mulf %42, %43 : vector<4x2xf32>
    %45 = vector.extract_strided_slice %23 {offsets = [1, 0], sizes = [63, 2], strides = [1, 1]} : vector<64x2xf32> to vector<63x2xf32>
    %cst_2 = arith.constant 0.000000e+00 : f32
    %46 = vector.broadcast %cst_2 : f32 to vector<1x2xf32>
    %47 = tpu.concatenate %45, %46 in 0 : vector<63x2xf32>, vector<1x2xf32> -> vector<64x2xf32>
    %48 = arith.mulf %23, %47 : vector<64x2xf32>
    %49 = vector.extract_strided_slice %48 {offsets = [0, 0], sizes = [8, 2], strides = [1, 1]} : vector<64x2xf32> to vector<8x2xf32>
    %50 = vector.extract_strided_slice %48 {offsets = [8, 0], sizes = [8, 2], strides = [1, 1]} : vector<64x2xf32> to vector<8x2xf32>
    %51 = arith.addf %49, %50 : vector<8x2xf32>
    %52 = vector.extract_strided_slice %48 {offsets = [16, 0], sizes = [8, 2], strides = [1, 1]} : vector<64x2xf32> to vector<8x2xf32>
    %53 = arith.addf %51, %52 : vector<8x2xf32>
    %54 = vector.extract_strided_slice %48 {offsets = [24, 0], sizes = [8, 2], strides = [1, 1]} : vector<64x2xf32> to vector<8x2xf32>
    %55 = arith.addf %53, %54 : vector<8x2xf32>
    %56 = vector.extract_strided_slice %48 {offsets = [32, 0], sizes = [8, 2], strides = [1, 1]} : vector<64x2xf32> to vector<8x2xf32>
    %57 = arith.addf %55, %56 : vector<8x2xf32>
    %58 = vector.extract_strided_slice %48 {offsets = [40, 0], sizes = [8, 2], strides = [1, 1]} : vector<64x2xf32> to vector<8x2xf32>
    %59 = arith.addf %57, %58 : vector<8x2xf32>
    %60 = vector.extract_strided_slice %48 {offsets = [48, 0], sizes = [8, 2], strides = [1, 1]} : vector<64x2xf32> to vector<8x2xf32>
    %61 = arith.addf %59, %60 : vector<8x2xf32>
    %62 = vector.extract_strided_slice %48 {offsets = [56, 0], sizes = [8, 2], strides = [1, 1]} : vector<64x2xf32> to vector<8x2xf32>
    %63 = arith.addf %61, %62 : vector<8x2xf32>
    %64 = vector.extract_strided_slice %63 {offsets = [0, 0], sizes = [4, 2], strides = [1, 1]} : vector<8x2xf32> to vector<4x2xf32>
    %65 = vector.extract_strided_slice %63 {offsets = [4, 0], sizes = [4, 2], strides = [1, 1]} : vector<8x2xf32> to vector<4x2xf32>
    %66 = arith.addf %64, %65 : vector<4x2xf32>
    %cst_3 = arith.constant 0.0666666701 : f32
    %67 = vector.broadcast %cst_3 : f32 to vector<4x2xf32>
    %68 = arith.mulf %66, %67 : vector<4x2xf32>
    %69 = vector.extract_strided_slice %23 {offsets = [2, 0], sizes = [62, 2], strides = [1, 1]} : vector<64x2xf32> to vector<62x2xf32>
    %cst_4 = arith.constant 0.000000e+00 : f32
    %70 = vector.broadcast %cst_4 : f32 to vector<2x2xf32>
    %71 = tpu.concatenate %69, %70 in 0 : vector<62x2xf32>, vector<2x2xf32> -> vector<64x2xf32>
    %72 = arith.mulf %23, %71 : vector<64x2xf32>
    %73 = vector.extract_strided_slice %72 {offsets = [0, 0], sizes = [8, 2], strides = [1, 1]} : vector<64x2xf32> to vector<8x2xf32>
    %74 = vector.extract_strided_slice %72 {offsets = [8, 0], sizes = [8, 2], strides = [1, 1]} : vector<64x2xf32> to vector<8x2xf32>
    %75 = arith.addf %73, %74 : vector<8x2xf32>
    %76 = vector.extract_strided_slice %72 {offsets = [16, 0], sizes = [8, 2], strides = [1, 1]} : vector<64x2xf32> to vector<8x2xf32>
    %77 = arith.addf %75, %76 : vector<8x2xf32>
    %78 = vector.extract_strided_slice %72 {offsets = [24, 0], sizes = [8, 2], strides = [1, 1]} : vector<64x2xf32> to vector<8x2xf32>
    %79 = arith.addf %77, %78 : vector<8x2xf32>
    %80 = vector.extract_strided_slice %72 {offsets = [32, 0], sizes = [8, 2], strides = [1, 1]} : vector<64x2xf32> to vector<8x2xf32>
    %81 = arith.addf %79, %80 : vector<8x2xf32>
    %82 = vector.extract_strided_slice %72 {offsets = [40, 0], sizes = [8, 2], strides = [1, 1]} : vector<64x2xf32> to vector<8x2xf32>
    %83 = arith.addf %81, %82 : vector<8x2xf32>
    %84 = vector.extract_strided_slice %72 {offsets = [48, 0], sizes = [8, 2], strides = [1, 1]} : vector<64x2xf32> to vector<8x2xf32>
    %85 = arith.addf %83, %84 : vector<8x2xf32>
    %86 = vector.extract_strided_slice %72 {offsets = [56, 0], sizes = [8, 2], strides = [1, 1]} : vector<64x2xf32> to vector<8x2xf32>
    %87 = arith.addf %85, %86 : vector<8x2xf32>
    %88 = vector.extract_strided_slice %87 {offsets = [0, 0], sizes = [4, 2], strides = [1, 1]} : vector<8x2xf32> to vector<4x2xf32>
    %89 = vector.extract_strided_slice %87 {offsets = [4, 0], sizes = [4, 2], strides = [1, 1]} : vector<8x2xf32> to vector<4x2xf32>
    %90 = arith.addf %88, %89 : vector<4x2xf32>
    %cst_5 = arith.constant 0.0666666701 : f32
    %91 = vector.broadcast %cst_5 : f32 to vector<4x2xf32>
    %92 = arith.mulf %90, %91 : vector<4x2xf32>
    %93 = vector.extract_strided_slice %23 {offsets = [3, 0], sizes = [61, 2], strides = [1, 1]} : vector<64x2xf32> to vector<61x2xf32>
    %cst_6 = arith.constant 0.000000e+00 : f32
    %94 = vector.broadcast %cst_6 : f32 to vector<3x2xf32>
    %95 = tpu.concatenate %93, %94 in 0 : vector<61x2xf32>, vector<3x2xf32> -> vector<64x2xf32>
    %96 = arith.mulf %23, %95 : vector<64x2xf32>
    %97 = vector.extract_strided_slice %96 {offsets = [0, 0], sizes = [8, 2], strides = [1, 1]} : vector<64x2xf32> to vector<8x2xf32>
    %98 = vector.extract_strided_slice %96 {offsets = [8, 0], sizes = [8, 2], strides = [1, 1]} : vector<64x2xf32> to vector<8x2xf32>
    %99 = arith.addf %97, %98 : vector<8x2xf32>
    %100 = vector.extract_strided_slice %96 {offsets = [16, 0], sizes = [8, 2], strides = [1, 1]} : vector<64x2xf32> to vector<8x2xf32>
    %101 = arith.addf %99, %100 : vector<8x2xf32>
    %102 = vector.extract_strided_slice %96 {offsets = [24, 0], sizes = [8, 2], strides = [1, 1]} : vector<64x2xf32> to vector<8x2xf32>
    %103 = arith.addf %101, %102 : vector<8x2xf32>
    %104 = vector.extract_strided_slice %96 {offsets = [32, 0], sizes = [8, 2], strides = [1, 1]} : vector<64x2xf32> to vector<8x2xf32>
    %105 = arith.addf %103, %104 : vector<8x2xf32>
    %106 = vector.extract_strided_slice %96 {offsets = [40, 0], sizes = [8, 2], strides = [1, 1]} : vector<64x2xf32> to vector<8x2xf32>
    %107 = arith.addf %105, %106 : vector<8x2xf32>
    %108 = vector.extract_strided_slice %96 {offsets = [48, 0], sizes = [8, 2], strides = [1, 1]} : vector<64x2xf32> to vector<8x2xf32>
    %109 = arith.addf %107, %108 : vector<8x2xf32>
    %110 = vector.extract_strided_slice %96 {offsets = [56, 0], sizes = [8, 2], strides = [1, 1]} : vector<64x2xf32> to vector<8x2xf32>
    %111 = arith.addf %109, %110 : vector<8x2xf32>
    %112 = vector.extract_strided_slice %111 {offsets = [0, 0], sizes = [4, 2], strides = [1, 1]} : vector<8x2xf32> to vector<4x2xf32>
    %113 = vector.extract_strided_slice %111 {offsets = [4, 0], sizes = [4, 2], strides = [1, 1]} : vector<8x2xf32> to vector<4x2xf32>
    %114 = arith.addf %112, %113 : vector<4x2xf32>
    %cst_7 = arith.constant 0.0666666701 : f32
    %115 = vector.broadcast %cst_7 : f32 to vector<4x2xf32>
    %116 = arith.mulf %114, %115 : vector<4x2xf32>
    %cst_8 = arith.constant 1.000000e+00 : f32
    %117 = vector.broadcast %cst_8 : f32 to vector<1x2xf32>
    %cst_9 = arith.constant 0.000000e+00 : f32
    %118 = vector.broadcast %cst_9 : f32 to vector<1x2xf32>
    %119 = vector.extract_strided_slice %44 {offsets = [0, 0], sizes = [1, 2], strides = [1, 1]} : vector<4x2xf32> to vector<1x2xf32>
    %120 = vector.extract_strided_slice %68 {offsets = [0, 0], sizes = [1, 2], strides = [1, 1]} : vector<4x2xf32> to vector<1x2xf32>
    %121 = vector.extract_strided_slice %92 {offsets = [0, 0], sizes = [1, 2], strides = [1, 1]} : vector<4x2xf32> to vector<1x2xf32>
    %122 = vector.extract_strided_slice %116 {offsets = [0, 0], sizes = [1, 2], strides = [1, 1]} : vector<4x2xf32> to vector<1x2xf32>
    %123 = tpu.concatenate %119, %120, %121, %122, %117, %118 in 0 : vector<1x2xf32>, vector<1x2xf32>, vector<1x2xf32>, vector<1x2xf32>, vector<1x2xf32>, vector<1x2xf32> -> vector<6x2xf32>
    %124 = vector.extract_strided_slice %68 {offsets = [0, 0], sizes = [1, 2], strides = [1, 1]} : vector<4x2xf32> to vector<1x2xf32>
    %125 = vector.extract_strided_slice %44 {offsets = [1, 0], sizes = [1, 2], strides = [1, 1]} : vector<4x2xf32> to vector<1x2xf32>
    %126 = vector.extract_strided_slice %68 {offsets = [1, 0], sizes = [1, 2], strides = [1, 1]} : vector<4x2xf32> to vector<1x2xf32>
    %127 = vector.extract_strided_slice %92 {offsets = [1, 0], sizes = [1, 2], strides = [1, 1]} : vector<4x2xf32> to vector<1x2xf32>
    %128 = tpu.concatenate %124, %125, %126, %127, %117, %118 in 0 : vector<1x2xf32>, vector<1x2xf32>, vector<1x2xf32>, vector<1x2xf32>, vector<1x2xf32>, vector<1x2xf32> -> vector<6x2xf32>
    %129 = vector.extract_strided_slice %92 {offsets = [0, 0], sizes = [1, 2], strides = [1, 1]} : vector<4x2xf32> to vector<1x2xf32>
    %130 = vector.extract_strided_slice %68 {offsets = [1, 0], sizes = [1, 2], strides = [1, 1]} : vector<4x2xf32> to vector<1x2xf32>
    %131 = vector.extract_strided_slice %44 {offsets = [2, 0], sizes = [1, 2], strides = [1, 1]} : vector<4x2xf32> to vector<1x2xf32>
    %132 = vector.extract_strided_slice %68 {offsets = [2, 0], sizes = [1, 2], strides = [1, 1]} : vector<4x2xf32> to vector<1x2xf32>
    %133 = tpu.concatenate %129, %130, %131, %132, %117, %118 in 0 : vector<1x2xf32>, vector<1x2xf32>, vector<1x2xf32>, vector<1x2xf32>, vector<1x2xf32>, vector<1x2xf32> -> vector<6x2xf32>
    %134 = vector.extract_strided_slice %116 {offsets = [0, 0], sizes = [1, 2], strides = [1, 1]} : vector<4x2xf32> to vector<1x2xf32>
    %135 = vector.extract_strided_slice %92 {offsets = [1, 0], sizes = [1, 2], strides = [1, 1]} : vector<4x2xf32> to vector<1x2xf32>
    %136 = vector.extract_strided_slice %68 {offsets = [2, 0], sizes = [1, 2], strides = [1, 1]} : vector<4x2xf32> to vector<1x2xf32>
    %137 = vector.extract_strided_slice %44 {offsets = [3, 0], sizes = [1, 2], strides = [1, 1]} : vector<4x2xf32> to vector<1x2xf32>
    %138 = tpu.concatenate %134, %135, %136, %137, %117, %118 in 0 : vector<1x2xf32>, vector<1x2xf32>, vector<1x2xf32>, vector<1x2xf32>, vector<1x2xf32>, vector<1x2xf32> -> vector<6x2xf32>
    %139 = tpu.concatenate %117, %117, %117, %117, %118, %117 in 0 : vector<1x2xf32>, vector<1x2xf32>, vector<1x2xf32>, vector<1x2xf32>, vector<1x2xf32>, vector<1x2xf32> -> vector<6x2xf32>
    %140 = vector.extract_strided_slice %123 {offsets = [0, 0], sizes = [1, 2], strides = [1, 1]} : vector<6x2xf32> to vector<1x2xf32>
    %141 = tpu.reciprocal %140 {approx = true} : vector<1x2xf32> -> vector<1x2xf32>
    %142 = arith.mulf %140, %141 : vector<1x2xf32>
    %cst_10 = arith.constant 2.000000e+00 : f32
    %143 = vector.broadcast %cst_10 : f32 to vector<1x2xf32>
    %144 = arith.subf %143, %142 : vector<1x2xf32>
    %145 = arith.mulf %141, %144 : vector<1x2xf32>
    %146 = vector.broadcast %145 : vector<1x2xf32> to vector<6x2xf32>
    %147 = arith.mulf %123, %146 : vector<6x2xf32>
    %148 = vector.extract_strided_slice %128 {offsets = [0, 0], sizes = [1, 2], strides = [1, 1]} : vector<6x2xf32> to vector<1x2xf32>
    %149 = vector.broadcast %148 : vector<1x2xf32> to vector<6x2xf32>
    %150 = arith.mulf %149, %147 : vector<6x2xf32>
    %151 = arith.subf %128, %150 : vector<6x2xf32>
    %152 = vector.extract_strided_slice %133 {offsets = [0, 0], sizes = [1, 2], strides = [1, 1]} : vector<6x2xf32> to vector<1x2xf32>
    %153 = vector.broadcast %152 : vector<1x2xf32> to vector<6x2xf32>
    %154 = arith.mulf %153, %147 : vector<6x2xf32>
    %155 = arith.subf %133, %154 : vector<6x2xf32>
    %156 = vector.extract_strided_slice %138 {offsets = [0, 0], sizes = [1, 2], strides = [1, 1]} : vector<6x2xf32> to vector<1x2xf32>
    %157 = vector.broadcast %156 : vector<1x2xf32> to vector<6x2xf32>
    %158 = arith.mulf %157, %147 : vector<6x2xf32>
    %159 = arith.subf %138, %158 : vector<6x2xf32>
    %160 = vector.extract_strided_slice %139 {offsets = [0, 0], sizes = [1, 2], strides = [1, 1]} : vector<6x2xf32> to vector<1x2xf32>
    %161 = vector.broadcast %160 : vector<1x2xf32> to vector<6x2xf32>
    %162 = arith.mulf %161, %147 : vector<6x2xf32>
    %163 = arith.subf %139, %162 : vector<6x2xf32>
    %164 = vector.extract_strided_slice %151 {offsets = [1, 0], sizes = [1, 2], strides = [1, 1]} : vector<6x2xf32> to vector<1x2xf32>
    %165 = tpu.reciprocal %164 {approx = true} : vector<1x2xf32> -> vector<1x2xf32>
    %166 = arith.mulf %164, %165 : vector<1x2xf32>
    %cst_11 = arith.constant 2.000000e+00 : f32
    %167 = vector.broadcast %cst_11 : f32 to vector<1x2xf32>
    %168 = arith.subf %167, %166 : vector<1x2xf32>
    %169 = arith.mulf %165, %168 : vector<1x2xf32>
    %170 = vector.broadcast %169 : vector<1x2xf32> to vector<6x2xf32>
    %171 = arith.mulf %151, %170 : vector<6x2xf32>
    %172 = vector.extract_strided_slice %147 {offsets = [1, 0], sizes = [1, 2], strides = [1, 1]} : vector<6x2xf32> to vector<1x2xf32>
    %173 = vector.broadcast %172 : vector<1x2xf32> to vector<6x2xf32>
    %174 = arith.mulf %173, %171 : vector<6x2xf32>
    %175 = arith.subf %147, %174 : vector<6x2xf32>
    %176 = vector.extract_strided_slice %155 {offsets = [1, 0], sizes = [1, 2], strides = [1, 1]} : vector<6x2xf32> to vector<1x2xf32>
    %177 = vector.broadcast %176 : vector<1x2xf32> to vector<6x2xf32>
    %178 = arith.mulf %177, %171 : vector<6x2xf32>
    %179 = arith.subf %155, %178 : vector<6x2xf32>
    %180 = vector.extract_strided_slice %159 {offsets = [1, 0], sizes = [1, 2], strides = [1, 1]} : vector<6x2xf32> to vector<1x2xf32>
    %181 = vector.broadcast %180 : vector<1x2xf32> to vector<6x2xf32>
    %182 = arith.mulf %181, %171 : vector<6x2xf32>
    %183 = arith.subf %159, %182 : vector<6x2xf32>
    %184 = vector.extract_strided_slice %163 {offsets = [1, 0], sizes = [1, 2], strides = [1, 1]} : vector<6x2xf32> to vector<1x2xf32>
    %185 = vector.broadcast %184 : vector<1x2xf32> to vector<6x2xf32>
    %186 = arith.mulf %185, %171 : vector<6x2xf32>
    %187 = arith.subf %163, %186 : vector<6x2xf32>
    %188 = vector.extract_strided_slice %179 {offsets = [2, 0], sizes = [1, 2], strides = [1, 1]} : vector<6x2xf32> to vector<1x2xf32>
    %189 = tpu.reciprocal %188 {approx = true} : vector<1x2xf32> -> vector<1x2xf32>
    %190 = arith.mulf %188, %189 : vector<1x2xf32>
    %cst_12 = arith.constant 2.000000e+00 : f32
    %191 = vector.broadcast %cst_12 : f32 to vector<1x2xf32>
    %192 = arith.subf %191, %190 : vector<1x2xf32>
    %193 = arith.mulf %189, %192 : vector<1x2xf32>
    %194 = vector.broadcast %193 : vector<1x2xf32> to vector<6x2xf32>
    %195 = arith.mulf %179, %194 : vector<6x2xf32>
    %196 = vector.extract_strided_slice %175 {offsets = [2, 0], sizes = [1, 2], strides = [1, 1]} : vector<6x2xf32> to vector<1x2xf32>
    %197 = vector.broadcast %196 : vector<1x2xf32> to vector<6x2xf32>
    %198 = arith.mulf %197, %195 : vector<6x2xf32>
    %199 = arith.subf %175, %198 : vector<6x2xf32>
    %200 = vector.extract_strided_slice %171 {offsets = [2, 0], sizes = [1, 2], strides = [1, 1]} : vector<6x2xf32> to vector<1x2xf32>
    %201 = vector.broadcast %200 : vector<1x2xf32> to vector<6x2xf32>
    %202 = arith.mulf %201, %195 : vector<6x2xf32>
    %203 = arith.subf %171, %202 : vector<6x2xf32>
    %204 = vector.extract_strided_slice %183 {offsets = [2, 0], sizes = [1, 2], strides = [1, 1]} : vector<6x2xf32> to vector<1x2xf32>
    %205 = vector.broadcast %204 : vector<1x2xf32> to vector<6x2xf32>
    %206 = arith.mulf %205, %195 : vector<6x2xf32>
    %207 = arith.subf %183, %206 : vector<6x2xf32>
    %208 = vector.extract_strided_slice %187 {offsets = [2, 0], sizes = [1, 2], strides = [1, 1]} : vector<6x2xf32> to vector<1x2xf32>
    %209 = vector.broadcast %208 : vector<1x2xf32> to vector<6x2xf32>
    %210 = arith.mulf %209, %195 : vector<6x2xf32>
    %211 = arith.subf %187, %210 : vector<6x2xf32>
    %212 = vector.extract_strided_slice %207 {offsets = [3, 0], sizes = [1, 2], strides = [1, 1]} : vector<6x2xf32> to vector<1x2xf32>
    %213 = tpu.reciprocal %212 {approx = true} : vector<1x2xf32> -> vector<1x2xf32>
    %214 = arith.mulf %212, %213 : vector<1x2xf32>
    %cst_13 = arith.constant 2.000000e+00 : f32
    %215 = vector.broadcast %cst_13 : f32 to vector<1x2xf32>
    %216 = arith.subf %215, %214 : vector<1x2xf32>
    %217 = arith.mulf %213, %216 : vector<1x2xf32>
    %218 = vector.broadcast %217 : vector<1x2xf32> to vector<6x2xf32>
    %219 = arith.mulf %207, %218 : vector<6x2xf32>
    %220 = vector.extract_strided_slice %199 {offsets = [3, 0], sizes = [1, 2], strides = [1, 1]} : vector<6x2xf32> to vector<1x2xf32>
    %221 = vector.broadcast %220 : vector<1x2xf32> to vector<6x2xf32>
    %222 = arith.mulf %221, %219 : vector<6x2xf32>
    %223 = arith.subf %199, %222 : vector<6x2xf32>
    %224 = vector.extract_strided_slice %203 {offsets = [3, 0], sizes = [1, 2], strides = [1, 1]} : vector<6x2xf32> to vector<1x2xf32>
    %225 = vector.broadcast %224 : vector<1x2xf32> to vector<6x2xf32>
    %226 = arith.mulf %225, %219 : vector<6x2xf32>
    %227 = arith.subf %203, %226 : vector<6x2xf32>
    %228 = vector.extract_strided_slice %195 {offsets = [3, 0], sizes = [1, 2], strides = [1, 1]} : vector<6x2xf32> to vector<1x2xf32>
    %229 = vector.broadcast %228 : vector<1x2xf32> to vector<6x2xf32>
    %230 = arith.mulf %229, %219 : vector<6x2xf32>
    %231 = arith.subf %195, %230 : vector<6x2xf32>
    %232 = vector.extract_strided_slice %211 {offsets = [3, 0], sizes = [1, 2], strides = [1, 1]} : vector<6x2xf32> to vector<1x2xf32>
    %233 = vector.broadcast %232 : vector<1x2xf32> to vector<6x2xf32>
    %234 = arith.mulf %233, %219 : vector<6x2xf32>
    %235 = arith.subf %211, %234 : vector<6x2xf32>
    %236 = vector.extract_strided_slice %235 {offsets = [4, 0], sizes = [1, 2], strides = [1, 1]} : vector<6x2xf32> to vector<1x2xf32>
    %237 = tpu.reciprocal %236 {approx = true} : vector<1x2xf32> -> vector<1x2xf32>
    %238 = arith.mulf %236, %237 : vector<1x2xf32>
    %cst_14 = arith.constant 2.000000e+00 : f32
    %239 = vector.broadcast %cst_14 : f32 to vector<1x2xf32>
    %240 = arith.subf %239, %238 : vector<1x2xf32>
    %241 = arith.mulf %237, %240 : vector<1x2xf32>
    %242 = vector.broadcast %241 : vector<1x2xf32> to vector<6x2xf32>
    %243 = arith.mulf %235, %242 : vector<6x2xf32>
    %244 = vector.extract_strided_slice %223 {offsets = [4, 0], sizes = [1, 2], strides = [1, 1]} : vector<6x2xf32> to vector<1x2xf32>
    %245 = vector.broadcast %244 : vector<1x2xf32> to vector<6x2xf32>
    %246 = arith.mulf %245, %243 : vector<6x2xf32>
    %247 = arith.subf %223, %246 : vector<6x2xf32>
    %248 = vector.extract_strided_slice %227 {offsets = [4, 0], sizes = [1, 2], strides = [1, 1]} : vector<6x2xf32> to vector<1x2xf32>
    %249 = vector.broadcast %248 : vector<1x2xf32> to vector<6x2xf32>
    %250 = arith.mulf %249, %243 : vector<6x2xf32>
    %251 = arith.subf %227, %250 : vector<6x2xf32>
    %252 = vector.extract_strided_slice %231 {offsets = [4, 0], sizes = [1, 2], strides = [1, 1]} : vector<6x2xf32> to vector<1x2xf32>
    %253 = vector.broadcast %252 : vector<1x2xf32> to vector<6x2xf32>
    %254 = arith.mulf %253, %243 : vector<6x2xf32>
    %255 = arith.subf %231, %254 : vector<6x2xf32>
    %256 = vector.extract_strided_slice %219 {offsets = [4, 0], sizes = [1, 2], strides = [1, 1]} : vector<6x2xf32> to vector<1x2xf32>
    %257 = vector.broadcast %256 : vector<1x2xf32> to vector<6x2xf32>
    %258 = arith.mulf %257, %243 : vector<6x2xf32>
    %259 = arith.subf %219, %258 : vector<6x2xf32>
    %260 = vector.extract_strided_slice %247 {offsets = [5, 0], sizes = [1, 2], strides = [1, 1]} : vector<6x2xf32> to vector<1x2xf32>
    %261 = vector.extract_strided_slice %251 {offsets = [5, 0], sizes = [1, 2], strides = [1, 1]} : vector<6x2xf32> to vector<1x2xf32>
    %262 = vector.extract_strided_slice %255 {offsets = [5, 0], sizes = [1, 2], strides = [1, 1]} : vector<6x2xf32> to vector<1x2xf32>
    %263 = vector.extract_strided_slice %259 {offsets = [5, 0], sizes = [1, 2], strides = [1, 1]} : vector<6x2xf32> to vector<1x2xf32>
    %264 = vector.extract_strided_slice %243 {offsets = [5, 0], sizes = [1, 2], strides = [1, 1]} : vector<6x2xf32> to vector<1x2xf32>
    %265 = tpu.concatenate %260, %261, %262, %263, %264 in 0 : vector<1x2xf32>, vector<1x2xf32>, vector<1x2xf32>, vector<1x2xf32>, vector<1x2xf32> -> vector<5x2xf32>
    %c0_15 = arith.constant 0 : index
    %c0_16 = arith.constant 0 : index
    %266 = vector.load %arg2[%c0_15, %c0_16] : memref<5x2xf32, #tpu.memory_space<vmem>>, vector<5x2xf32>
    tpu.vector_store %arg2[%c0_15, %c0_16], %265 {strides = array<i32>} : memref<5x2xf32, #tpu.memory_space<vmem>>, vector<5x2xf32>,
    return
  }
  func.func @transform_0(%arg0: i32) -> (i32, i32) {
    %c0_i32 = arith.constant 0 : i32
    %c0_i32_0 = arith.constant 0 : i32
    return %arg0, %c0_i32 : i32, i32
  }
  func.func @transform_1(%arg0: i32) -> (i32, i32) {
    %c0_i32 = arith.constant 0 : i32
    %c0_i32_0 = arith.constant 0 : i32
    return %c0_i32, %arg0 : i32, i32
  }
}

</mosaic_0001>

<llo_original>
// kernel: tpu_custom_call.1
$region0: #{tpu_custom_call.1}
  #allocation0 [shape = 'u32[]', space=smem, size = 0x4, offset = 0x4, fixed_abs, tag = 'smem constant byte address 0x4 - core index']
  #allocation1 [shape = 'u32[144,128]{1,0:T(1,128)}', space=vmem, size = 0x12000, scoped, tag = 'internal scratch']
  %s0 = inlined_call_operand.hbm [shape: f32[2,64], index: 0, kind: input, shape index: {}]
  %s1 = inlined_call_operand.vmem [shape: f32[5,2], index: 1, kind: output, shape index: {}]
  %s2 = sld [smem:[#allocation0]]
  $region18: #{tpu_custom_call.1} parent=0
    _
  %s4 = ssub.s32 1, %s2
  %s5 = scalar_select 0, %s4, %s2
  $region1: #{tpu_custom_call.1} parent=0
    #allocation2 [shape = 'u8[1024]{0}', space=vmem, size = 0x400, scoped, tag = 'input window, operand 0, single buffered']
    #allocation3 [shape = 's32[1]{0}', space=sflag, size = 0x4, scoped, tag = 'scoped memory for tpu_custom_call.1']
    %6 = vsyncpa [#allocation3], 0
    // Predicated region
    $region2: #{tpu_custom_call.1} parent=1 // pred_check
      _
    $region3: #{tpu_custom_call.1} parent=1 // pred_check_branch
      %8 = sbr.rel (0) target = $region5
    $region4: #{tpu_custom_call.1} parent=1 // pred_region
      %s10 = ssub.s32 32, 32
      %11 = vsyncadd [#allocation3], %s10
      %s13 = sshll.u32 [#allocation2], 4
      %s14 = int_to_ptr.vmem [resolvable:$true] %s13
      %16 = dma.hbm_to_vmem [thread:$0]  %s0, 32, %s14, [#allocation3]
    $region5: #{tpu_custom_call.1} parent=1 // pred_fallthru
      _
    // Predicated region
    $region6: #{tpu_custom_call.1} parent=1 // pred_check
      _
    $region7: #{tpu_custom_call.1} parent=1 // pred_check_branch
      %18 = sbr.rel (0) target = $region9
    $region8: #{tpu_custom_call.1} parent=1 // pred_region
      %19 = dma.done [#allocation3], 32
    $region9: #{tpu_custom_call.1} parent=1 // pred_fallthru
      _
    %v20 = vld [vmem:[#allocation2] sm:$0x3]
    %21 = vxpose.xlu0.b32.start [1/16] %v20, 128
    %22 = vxpose.xlu0.b32.cont [2/16] 0.0, 128
    %23 = vxpose.xlu0.b32.cont [3/16] 0.0, 128
    %24 = vxpose.xlu0.b32.cont [4/16] 0.0, 128
    %25 = vxpose.xlu0.b32.cont [5/16] 0.0, 128
    %26 = vxpose.xlu0.b32.cont [6/16] 0.0, 128
    %27 = vxpose.xlu0.b32.cont [7/16] 0.0, 128
    %28 = vxpose.xlu0.b32.cont [8/16] 0.0, 128
    %29 = vxpose.xlu0.b32.cont [9/16] 0.0, 128
    %30 = vxpose.xlu0.b32.cont [10/16] 0.0, 128
    %31 = vxpose.xlu0.b32.cont [11/16] 0.0, 128
    %32 = vxpose.xlu0.b32.cont [12/16] 0.0, 128
    %33 = vxpose.xlu0.b32.cont [13/16] 0.0, 128
    %34 = vxpose.xlu0.b32.cont [14/16] 0.0, 128
    %35 = vxpose.xlu0.b32.cont [15/16] 0.0, 128
    %36 = vxpose.xlu0.b32.end [16/16] 0.0, 128
    %v37 = vpop.trf.xlu0
    %v38 = vpop.trf.xlu0
    %v39 = vpop.trf.xlu0
    %v40 = vpop.trf.xlu0
    %v41 = vpop.trf.xlu0
    %v42 = vpop.trf.xlu0
    %v43 = vpop.trf.xlu0
    %v44 = vpop.trf.xlu0
    %v45 = vpop.trf.xlu0
    %v46 = vpop.trf.xlu0
    %v47 = vpop.trf.xlu0
    %v48 = vpop.trf.xlu0
    %v49 = vpop.trf.xlu0
    %v50 = vpop.trf.xlu0
    %v51 = vpop.trf.xlu0
    %v52 = vpop.trf.xlu0
    %v53 = vadd.f32 %v37, %v38
    %v54 = vadd.f32 %v53, %v39
    %v55 = vadd.f32 %v54, %v40
    %v56 = vadd.f32 %v55, %v41
    %v57 = vadd.f32 %v56, %v42
    %v58 = vadd.f32 %v57, %v43
    %v59 = vadd.f32 %v58, %v44
    %v61 = vrot.slane %v59, 4
    %v63 = vadd.f32 %v59, %v61
    %v64 = vmul.f32 %v63, 0.0625
    %v66 = vrot.slane %v64, 4
    %vm68 = vcmask 1043456
    %v69 = vsel %vm68, %v64, %v66
    %v70 = vsub.f32 %v37, %v69
    %v71 = vsub.f32 %v38, %v69
    %v72 = vsub.f32 %v39, %v69
    %v73 = vsub.f32 %v40, %v69
    %v74 = vsub.f32 %v41, %v69
    %v75 = vsub.f32 %v42, %v69
    %v76 = vsub.f32 %v43, %v69
    %v77 = vsub.f32 %v44, %v69
    %v78 = vmul.f32 %v70, %v70
    %v79 = vmul.f32 %v71, %v71
    %v80 = vmul.f32 %v72, %v72
    %v81 = vmul.f32 %v73, %v73
    %v82 = vmul.f32 %v74, %v74
    %v83 = vmul.f32 %v75, %v75
    %v84 = vmul.f32 %v76, %v76
    %v85 = vmul.f32 %v77, %v77
    %v86 = vadd.f32 %v78, %v79
    %v87 = vadd.f32 %v86, %v80
    %v88 = vadd.f32 %v87, %v81
    %v89 = vadd.f32 %v88, %v82
    %v90 = vadd.f32 %v89, %v83
    %v91 = vadd.f32 %v90, %v84
    %v92 = vadd.f32 %v91, %v85
    %v94 = vrot.slane %v92, 4
    %v96 = vadd.f32 %v92, %v94
    %v97 = vmul.f32 %v96, 0.06666667
    %vm106 = vcmask 1046528
    %v107 = vrot.slane %v70, 1
    %v108 = vrot.slane %v71, 1
    %v109 = vsel %vm106, %v107, %v108
    %v110 = vrot.slane %v72, 1
    %v111 = vsel %vm106, %v108, %v110
    %v112 = vrot.slane %v73, 1
    %v113 = vsel %vm106, %v110, %v112
    %v114 = vrot.slane %v74, 1
    %v115 = vsel %vm106, %v112, %v114
    %v116 = vrot.slane %v75, 1
    %v117 = vsel %vm106, %v114, %v116
    %v118 = vrot.slane %v76, 1
    %v119 = vsel %vm106, %v116, %v118
    %v120 = vrot.slane %v77, 1
    %v121 = vsel %vm106, %v118, %v120
    %v130 = vsel %vm106, %v120, 0.0
    %v131 = vmul.f32 %v70, %v109
    %v132 = vmul.f32 %v71, %v111
    %v133 = vmul.f32 %v72, %v113
    %v134 = vmul.f32 %v73, %v115
    %v135 = vmul.f32 %v74, %v117
    %v136 = vmul.f32 %v75, %v119
    %v137 = vmul.f32 %v76, %v121
    %v138 = vmul.f32 %v77, %v130
    %v139 = vadd.f32 %v131, %v132
    %v140 = vadd.f32 %v139, %v133
    %v141 = vadd.f32 %v140, %v134
    %v142 = vadd.f32 %v141, %v135
    %v143 = vadd.f32 %v142, %v136
    %v144 = vadd.f32 %v143, %v137
    %v145 = vadd.f32 %v144, %v138
    %v147 = vrot.slane %v145, 4
    %v149 = vadd.f32 %v145, %v147
    %v150 = vmul.f32 %v149, 0.06666667
    %vm151 = vcmask 1045504
    %v152 = vrot.slane %v70, 2
    %v153 = vrot.slane %v71, 2
    %v154 = vsel %vm151, %v152, %v153
    %v155 = vrot.slane %v72, 2
    %v156 = vsel %vm151, %v153, %v155
    %v157 = vrot.slane %v73, 2
    %v158 = vsel %vm151, %v155, %v157
    %v159 = vrot.slane %v74, 2
    %v160 = vsel %vm151, %v157, %v159
    %v161 = vrot.slane %v75, 2
    %v162 = vsel %vm151, %v159, %v161
    %v163 = vrot.slane %v76, 2
    %v164 = vsel %vm151, %v161, %v163
    %v165 = vrot.slane %v77, 2
    %v166 = vsel %vm151, %v163, %v165
    %v175 = vsel %vm151, %v165, 0.0
    %v176 = vmul.f32 %v70, %v154
    %v177 = vmul.f32 %v71, %v156
    %v178 = vmul.f32 %v72, %v158
    %v179 = vmul.f32 %v73, %v160
    %v180 = vmul.f32 %v74, %v162
    %v181 = vmul.f32 %v75, %v164
    %v182 = vmul.f32 %v76, %v166
    %v183 = vmul.f32 %v77, %v175
    %v184 = vadd.f32 %v176, %v177
    %v185 = vadd.f32 %v184, %v178
    %v186 = vadd.f32 %v185, %v179
    %v187 = vadd.f32 %v186, %v180
    %v188 = vadd.f32 %v187, %v181
    %v189 = vadd.f32 %v188, %v182
    %v190 = vadd.f32 %v189, %v183
    %v192 = vrot.slane %v190, 4
    %v194 = vadd.f32 %v190, %v192
    %v195 = vmul.f32 %v194, 0.06666667
    %vm196 = vcmask 1044480
    %v197 = vrot.slane %v70, 3
    %v198 = vrot.slane %v71, 3
    %v199 = vsel %vm196, %v197, %v198
    %v200 = vrot.slane %v72, 3
    %v201 = vsel %vm196, %v198, %v200
    %v202 = vrot.slane %v73, 3
    %v203 = vsel %vm196, %v200, %v202
    %v204 = vrot.slane %v74, 3
    %v205 = vsel %vm196, %v202, %v204
    %v206 = vrot.slane %v75, 3
    %v207 = vsel %vm196, %v204, %v206
    %v208 = vrot.slane %v76, 3
    %v209 = vsel %vm196, %v206, %v208
    %v210 = vrot.slane %v77, 3
    %v211 = vsel %vm196, %v208, %v210
    %v220 = vsel %vm196, %v210, 0.0
    %v221 = vmul.f32 %v70, %v199
    %v222 = vmul.f32 %v71, %v201
    %v223 = vmul.f32 %v72, %v203
    %v224 = vmul.f32 %v73, %v205
    %v225 = vmul.f32 %v74, %v207
    %v226 = vmul.f32 %v75, %v209
    %v227 = vmul.f32 %v76, %v211
    %v228 = vmul.f32 %v77, %v220
    %v229 = vadd.f32 %v221, %v222
    %v230 = vadd.f32 %v229, %v223
    %v231 = vadd.f32 %v230, %v224
    %v232 = vadd.f32 %v231, %v225
    %v233 = vadd.f32 %v232, %v226
    %v234 = vadd.f32 %v233, %v227
    %v235 = vadd.f32 %v234, %v228
    %v237 = vrot.slane %v235, 4
    %v239 = vadd.f32 %v235, %v237
    %v240 = vmul.f32 %v239, 0.06666667
    %v242 = vrot.slane %v150, 7
    %v245 = vrot.slane %v195, 6
    %v248 = vrot.slane %v240, 5
    %vm250 = vcmask 1040384
    %v251 = vsel %vm250, %v97, %v242
    %vm252 = vcmask 1041408
    %v253 = vsel %vm252, %v251, %v245
    %vm254 = vcmask 1042432
    %v255 = vsel %vm254, %v253, %v248
    %v256 = vsel %vm68, %v255, 1.0
    %v257 = vsel %vm196, %v256, 0.0
    %v258 = vsel %vm250, %v150, %v97
    %v259 = vsel %vm252, %v258, %v242
    %v260 = vsel %vm254, %v259, %v245
    %v261 = vsel %vm68, %v260, 1.0
    %v262 = vsel %vm196, %v261, 0.0
    %v263 = vsel %vm250, %v195, %v150
    %v264 = vsel %vm252, %v263, %v97
    %v265 = vsel %vm254, %v264, %v242
    %v266 = vsel %vm68, %v265, 1.0
    %v267 = vsel %vm196, %v266, 0.0
    %v268 = vsel %vm250, %v240, %v195
    %v269 = vsel %vm252, %v268, %v150
    %v270 = vsel %vm254, %v269, %v97
    %v271 = vsel %vm68, %v270, 1.0
    %v272 = vsel %vm196, %v271, 0.0
    %v273 = vsel %vm68, 1.0, 0.0
    %v274 = vsel %vm196, %v273, 1.0
    %v275 = vrcp.pop %v257
    %v276 = vmul.f32 %v257, %v275
    %v277 = vsub.f32 2.0, %v276
    %v278 = vmul.f32 %v275, %v277
    %v279 = vlaneseq
    %v280 = vshrl.u32 %v279, 7
    %v281 = vsub.s32 0, %v280
    %v282 = vrot.slane %v278, %v281
    %v283 = vmul.f32 %v257, %v282
    %v284 = vlaneseq
    %v285 = vshrl.u32 %v284, 7
    %v286 = vsub.s32 0, %v285
    %v287 = vrot.slane %v262, %v286
    %v288 = vmul.f32 %v287, %v283
    %v289 = vsub.f32 %v262, %v288
    %v290 = vlaneseq
    %v291 = vshrl.u32 %v290, 7
    %v292 = vsub.s32 0, %v291
    %v293 = vrot.slane %v267, %v292
    %v294 = vmul.f32 %v293, %v283
    %v295 = vsub.f32 %v267, %v294
    %v296 = vlaneseq
    %v297 = vshrl.u32 %v296, 7
    %v298 = vsub.s32 0, %v297
    %v299 = vrot.slane %v272, %v298
    %v300 = vmul.f32 %v299, %v283
    %v301 = vsub.f32 %v272, %v300
    %v302 = vlaneseq
    %v303 = vshrl.u32 %v302, 7
    %v304 = vsub.s32 0, %v303
    %v305 = vrot.slane %v274, %v304
    %v306 = vmul.f32 %v305, %v283
    %v307 = vsub.f32 %v274, %v306
    %v308 = vrcp.pop %v289
    %v309 = vmul.f32 %v289, %v308
    %v310 = vsub.f32 2.0, %v309
    %v311 = vmul.f32 %v308, %v310
    %v312 = vlaneseq
    %v313 = vshrl.u32 %v312, 7
    %v314 = vsub.s32 1, %v313
    %v315 = vrot.slane %v311, %v314
    %v316 = vmul.f32 %v289, %v315
    %v317 = vlaneseq
    %v318 = vshrl.u32 %v317, 7
    %v319 = vsub.s32 1, %v318
    %v320 = vrot.slane %v283, %v319
    %v321 = vmul.f32 %v320, %v316
    %v322 = vsub.f32 %v283, %v321
    %v323 = vlaneseq
    %v324 = vshrl.u32 %v323, 7
    %v325 = vsub.s32 1, %v324
    %v326 = vrot.slane %v295, %v325
    %v327 = vmul.f32 %v326, %v316
    %v328 = vsub.f32 %v295, %v327
    %v329 = vlaneseq
    %v330 = vshrl.u32 %v329, 7
    %v331 = vsub.s32 1, %v330
    %v332 = vrot.slane %v301, %v331
    %v333 = vmul.f32 %v332, %v316
    %v334 = vsub.f32 %v301, %v333
    %v335 = vlaneseq
    %v336 = vshrl.u32 %v335, 7
    %v337 = vsub.s32 1, %v336
    %v338 = vrot.slane %v307, %v337
    %v339 = vmul.f32 %v338, %v316
    %v340 = vsub.f32 %v307, %v339
    %v341 = vrcp.pop %v328
    %v342 = vmul.f32 %v328, %v341
    %v343 = vsub.f32 2.0, %v342
    %v344 = vmul.f32 %v341, %v343
    %v345 = vlaneseq
    %v346 = vshrl.u32 %v345, 7
    %v347 = vsub.s32 2, %v346
    %v348 = vrot.slane %v344, %v347
    %v349 = vmul.f32 %v328, %v348
    %v350 = vlaneseq
    %v351 = vshrl.u32 %v350, 7
    %v352 = vsub.s32 2, %v351
    %v353 = vrot.slane %v322, %v352
    %v354 = vmul.f32 %v353, %v349
    %v355 = vsub.f32 %v322, %v354
    %v356 = vlaneseq
    %v357 = vshrl.u32 %v356, 7
    %v358 = vsub.s32 2, %v357
    %v359 = vrot.slane %v316, %v358
    %v360 = vmul.f32 %v359, %v349
    %v361 = vsub.f32 %v316, %v360
    %v362 = vlaneseq
    %v363 = vshrl.u32 %v362, 7
    %v364 = vsub.s32 2, %v363
    %v365 = vrot.slane %v334, %v364
    %v366 = vmul.f32 %v365, %v349
    %v367 = vsub.f32 %v334, %v366
    %v368 = vlaneseq
    %v369 = vshrl.u32 %v368, 7
    %v370 = vsub.s32 2, %v369
    %v371 = vrot.slane %v340, %v370
    %v372 = vmul.f32 %v371, %v349
    %v373 = vsub.f32 %v340, %v372
    %v374 = vrcp.pop %v367
    %v375 = vmul.f32 %v367, %v374
    %v376 = vsub.f32 2.0, %v375
    %v377 = vmul.f32 %v374, %v376
    %v378 = vlaneseq
    %v379 = vshrl.u32 %v378, 7
    %v380 = vsub.s32 3, %v379
    %v381 = vrot.slane %v377, %v380
    %v382 = vmul.f32 %v367, %v381
    %v383 = vlaneseq
    %v384 = vshrl.u32 %v383, 7
    %v385 = vsub.s32 3, %v384
    %v386 = vrot.slane %v355, %v385
    %v387 = vmul.f32 %v386, %v382
    %v388 = vsub.f32 %v355, %v387
    %v389 = vlaneseq
    %v390 = vshrl.u32 %v389, 7
    %v391 = vsub.s32 3, %v390
    %v392 = vrot.slane %v361, %v391
    %v393 = vmul.f32 %v392, %v382
    %v394 = vsub.f32 %v361, %v393
    %v395 = vlaneseq
    %v396 = vshrl.u32 %v395, 7
    %v397 = vsub.s32 3, %v396
    %v398 = vrot.slane %v349, %v397
    %v399 = vmul.f32 %v398, %v382
    %v400 = vsub.f32 %v349, %v399
    %v401 = vlaneseq
    %v402 = vshrl.u32 %v401, 7
    %v403 = vsub.s32 3, %v402
    %v404 = vrot.slane %v373, %v403
    %v405 = vmul.f32 %v404, %v382
    %v406 = vsub.f32 %v373, %v405
    %v407 = vrcp.pop %v406
    %v408 = vmul.f32 %v406, %v407
    %v409 = vsub.f32 2.0, %v408
    %v410 = vmul.f32 %v407, %v409
    %v411 = vlaneseq
    %v412 = vshrl.u32 %v411, 7
    %v413 = vsub.s32 4, %v412
    %v414 = vrot.slane %v410, %v413
    %v415 = vmul.f32 %v406, %v414
    %v416 = vlaneseq
    %v417 = vshrl.u32 %v416, 7
    %v418 = vsub.s32 4, %v417
    %v419 = vrot.slane %v388, %v418
    %v420 = vmul.f32 %v419, %v415
    %v421 = vsub.f32 %v388, %v420
    %v422 = vlaneseq
    %v423 = vshrl.u32 %v422, 7
    %v424 = vsub.s32 4, %v423
    %v425 = vrot.slane %v394, %v424
    %v426 = vmul.f32 %v425, %v415
    %v427 = vsub.f32 %v394, %v426
    %v428 = vlaneseq
    %v429 = vshrl.u32 %v428, 7
    %v430 = vsub.s32 4, %v429
    %v431 = vrot.slane %v400, %v430
    %v432 = vmul.f32 %v431, %v415
    %v433 = vsub.f32 %v400, %v432
    %v434 = vlaneseq
    %v435 = vshrl.u32 %v434, 7
    %v436 = vsub.s32 4, %v435
    %v437 = vrot.slane %v382, %v436
    %v438 = vmul.f32 %v437, %v415
    %v439 = vsub.f32 %v382, %v438
    %v441 = vrot.slane %v421, 5
    %v444 = vrot.slane %v427, 4
    %v447 = vrot.slane %v433, 3
    %v450 = vrot.slane %v439, 2
    %v453 = vrot.slane %v415, 1
    %v455 = vsel %vm250, %v441, %v444
    %v456 = vsel %vm252, %v455, %v447
    %v457 = vsel %vm254, %v456, %v450
    %v458 = vsel %vm68, %v457, %v453
    %vm459 = vcmask 12288
    %460 = vst.msk [vmem:[%s1] sm:$0x1f] %vm459, %v458
    // Predicated region
    $region10: #{tpu_custom_call.1} parent=1 // pred_check
      _
    $region11: #{tpu_custom_call.1} parent=1 // pred_check_branch
      %462 = sbr.rel (0) target = $region13
    $region12: #{tpu_custom_call.1} parent=1 // pred_region
      _
    $region13: #{tpu_custom_call.1} parent=1 // pred_fallthru
      _
    // Predicated region
    $region14: #{tpu_custom_call.1} parent=1 // pred_check
      _
    $region15: #{tpu_custom_call.1} parent=1 // pred_check_branch
      %464 = sbr.rel (0) target = $region17
    $region16: #{tpu_custom_call.1} parent=1 // pred_region
      _
    $region17: #{tpu_custom_call.1} parent=1 // pred_fallthru
      _
    %465 = vsyncpa [#allocation3], 1

</llo_original>
